<compile_context>
chip_gen: v7x
topology: tpu7x:2x2x1
jax: 0.10.0
libtpu: 0.0.40
codegen_flags: <defaults>
</compile_context>

<pallas_src>
import functools

import jax
import jax.numpy as jnp
from jax import lax
from jax.experimental import pallas as pl
from jax.experimental.pallas import tpu as pltpu


# ----------------------------------------------------------------------------
# Hardware-aware sizing helpers.
# ----------------------------------------------------------------------------
def _vmem_capacity_bytes():
    """Per-core VMEM capacity; falls back to the v7x floor (64 MiB)."""
    try:
        return int(pltpu.get_tpu_info().vmem_capacity_bytes)
    except Exception:
        return 64 * 1024 * 1024


def _vmem_limit_bytes(cap):
    # Leave headroom for Mosaic internals: <= ~48 MiB on v7x (64 MiB phys),
    # up to ~96 MiB on v5e/v6e (128 MiB phys).
    return int(min(cap * 3 // 4, 96 * 1024 * 1024))


def _pick_row_tile(ho, per_row_bytes, fixed_bytes, budget_bytes):
    """Largest row tile whose per-grid-step footprint fits `budget_bytes`.

    Prefers a divisor of `ho` (no ragged last tile) but falls back to a
    non-divisor tile (grid uses cdiv + clipped boundary blocks) so awkward
    `ho` never silently degenerates to 1-row tiles.
    """
    avail = max(int(budget_bytes) - int(fixed_bytes), int(per_row_bytes))
    t = int(max(1, min(ho, avail // max(int(per_row_bytes), 1))))
    for d in range(t, 0, -1):
        if ho % d == 0:
            if 4 * d >= 3 * t:      # divisor within 25% of the budget tile
                return d
            break
    return t


# ----------------------------------------------------------------------------
# Single-pass NCHW -> parity-packed NHWC ("space-to-depth") packing.
#   out[n, p, q, (2*ry + rx)*C + c] = xpad[n, c, 2*p + ry, 2*q + rx]
# One XLA transpose (pad + dim splits are free/fused); no extra HBM passes.
# ----------------------------------------------------------------------------
def _parity_pack(x_nchw, pad):
    N, C, H, W = x_nchw.shape
    if pad:
        x_nchw = jnp.pad(x_nchw, ((0, 0), (0, 0), (0, pad), (0, pad)))
    Hp, Wp = H + pad, W + pad
    x6 = x_nchw.reshape(N, C, Hp // 2, 2, Wp // 2, 2)
    x6 = x6.transpose(0, 2, 4, 3, 5, 1)            # (N, H2, W2, ry, rx, C)
    return x6.reshape(N, Hp // 2, Wp // 2, 4 * C)


# ----------------------------------------------------------------------------
# Kernel 1: 3x3 / stride-2 conv on the parity-packed input.
#   out[i, j] = sum_{dy,dx in {0,1}} s2d[i+dy, j+dx, :] @ W_hat[dy, dx] + b
# where s2d has 4*Cin channels (2x2 pixel parity groups) and W_hat is the 3x3
# kernel re-packed onto that layout (zero where a tap falls outside 3x3).
# ----------------------------------------------------------------------------
def _down_conv_kernel(s_ref, h_ref, w_ref, b_ref, o_ref, xr_ref, *, toh, wo):
    # s_ref: (1, toh, wo+1, 4Cin) main rows ; h_ref: (1, 1, wo+1, 4Cin) halo row
    # w_ref: (2, 2, 4Cin, Coutp) ; b_ref: (1, Coutp) ; o_ref: (1, toh, wo, Coutp)
    # xr_ref: VMEM scratch (toh+1, wo+1, 4Cin) working window.
    cin4 = s_ref.shape[-1]
    coutp = o_ref.shape[-1]
    xr_ref[0:toh] = s_ref[0]
    xr_ref[toh:toh + 1] = h_ref[0]
    acc = jnp.zeros((toh * wo, coutp), jnp.float32)
    for dy in range(2):
        for dx in range(2):
            tap = xr_ref[dy:dy + toh, dx:dx + wo, :].reshape(toh * wo, cin4)
            acc = acc + jnp.dot(tap, w_ref[dy, dx],
                                preferred_element_type=jnp.float32)
    acc = acc + b_ref[...]
    o_ref[0] = acc.reshape(toh, wo, coutp).astype(o_ref.dtype)


def conv3x3_stride2_downsample(x_nchw, w_hwio, b, *, row_tile=None):
    N, Cin, H, W = x_nchw.shape
    assert H % 2 == 0 and W % 2 == 0, "even spatial dims expected"
    Cout = w_hwio.shape[-1]
    Ho, Wo = H // 2, W // 2
    cin4 = 4 * Cin
    # Lane-dense output stores (feedback): pad Cout up to a multiple of 128.
    Coutp = max(128, ((Cout + 127) // 128) * 128)

    # Pad bottom/right by 2 (the torch pad is 1; the extra row/col only ever
    # multiplies zeroed entries of W_hat) and parity-pack in one pass.
    s2d = _parity_pack(x_nchw, pad=2)              # (N, Ho+1, Wo+1, 4*Cin)

    # Repack the 3x3 weights onto the parity layout: W_hat[dy, dx] holds tap
    # (2*dy+ry, 2*dx+rx) in channel block p = 2*ry + rx (zero otherwise).
    w_hat = jnp.zeros((2, 2, cin4, Coutp), w_hwio.dtype)
    for dy in range(2):
        for dx in range(2):
            for ry in range(2):
                for rx in range(2):
                    ky, kx = 2 * dy + ry, 2 * dx + rx
                    if ky < 3 and kx < 3:
                        p = 2 * ry + rx
                        w_hat = w_hat.at[dy, dx, p * Cin:(p + 1) * Cin,
                                         :Cout].set(w_hwio[ky, kx])
    b_p = jnp.zeros((1, Coutp), b.dtype).at[0, :Cout].set(b)

    # VMEM budgeting: double-buffered main/out blocks + halo + resident
    # weights + scratch window + in-kernel f32 accumulator/temporaries.
    isz = jnp.dtype(x_nchw.dtype).itemsize
    cap = _vmem_capacity_bytes()
    fixed = 2 * (4 * cin4 * Coutp) * isz + 3 * (Wo + 1) * cin4 * isz
    per_row = (5 * (Wo + 1) * cin4 * isz            # 2x main buf + scratch + temps
               + 2 * Wo * Coutp * isz               # 2x output buffers
               + Wo * Coutp * 4)                    # f32 accumulator
    toh = row_tile if row_tile is not None else _pick_row_tile(
        Ho, per_row, fixed, cap // 4)
    toh = int(min(toh, Ho))
    n_tiles = pl.cdiv(Ho, toh)

    kernel = functools.partial(_down_conv_kernel, toh=toh, wo=Wo)
    out = pl.pallas_call(
        kernel,
        out_shape=jax.ShapeDtypeStruct((N, Ho, Wo, Coutp), x_nchw.dtype),
        grid=(N, n_tiles),
        in_specs=[
            # Main toh-row window of s2d.
            pl.BlockSpec((1, toh, Wo + 1, cin4), lambda n, t: (n, t, 0, 0)),
            # 1-row halo (row block size 1 => element row index); clamped for
            # a possible ragged last tile (its result rows are clipped anyway).
            pl.BlockSpec((1, 1, Wo + 1, cin4),
                         lambda n, t: (n, jnp.minimum((t + 1) * toh, Ho), 0, 0)),
            # Repacked weights + bias stay VMEM-resident.
            pl.BlockSpec((2, 2, cin4, Coutp), lambda n, t: (0, 0, 0, 0)),
            pl.BlockSpec((1, Coutp), lambda n, t: (0, 0)),
        ],
        out_specs=pl.BlockSpec((1, toh, Wo, Coutp), lambda n, t: (n, t, 0, 0)),
        scratch_shapes=[pltpu.VMEM((toh + 1, Wo + 1, cin4), x_nchw.dtype)],
        compiler_params=pltpu.CompilerParams(
            dimension_semantics=("parallel", "parallel"),
            vmem_limit_bytes=_vmem_limit_bytes(cap)),
    )(s2d, s2d, w_hat, b_p)
    # Strip the lane padding; this slice fuses into the caller's transpose.
    return out[..., :Cout]


# ----------------------------------------------------------------------------
# Kernel 2: 2x2 average pooling (stride 2) on the parity-packed input.
# Four contiguous lane slices summed on the VPU; no strided access needed.
# ----------------------------------------------------------------------------
def _avg_pool_kernel(x_ref, o_ref, *, c):
    # x_ref: (1, th, Wo, 4*C)   o_ref: (1, th, Wo, C)
    x = x_ref[0].astype(jnp.float32)
    s = (x[:, :, 0 * c:1 * c] + x[:, :, 1 * c:2 * c]
         + x[:, :, 2 * c:3 * c] + x[:, :, 3 * c:4 * c])
    o_ref[0] = (0.25 * s).astype(o_ref.dtype)


def avg_pool2x2(x_nchw, *, row_tile=None):
    N, C, H, W = x_nchw.shape
    assert H % 2 == 0 and W % 2 == 0, "even spatial dims expected"
    Ho, Wo = H // 2, W // 2
    s2d = _parity_pack(x_nchw, pad=0)               # (N, Ho, Wo, 4*C)

    isz = jnp.dtype(x_nchw.dtype).itemsize
    cap = _vmem_capacity_bytes()
    per_row = (2 * Wo * 4 * C * isz + 2 * Wo * C * isz   # in/out double buffers
               + Wo * 4 * C * 4 + Wo * C * 4)            # f32 temporaries
    th = row_tile if row_tile is not None else _pick_row_tile(
        Ho, per_row, 0, cap // 4)
    th = int(min(th, Ho))
    n_tiles = pl.cdiv(Ho, th)

    out = pl.pallas_call(
        functools.partial(_avg_pool_kernel, c=C),
        out_shape=jax.ShapeDtypeStruct((N, Ho, Wo, C), x_nchw.dtype),
        grid=(N, n_tiles),
        in_specs=[pl.BlockSpec((1, th, Wo, 4 * C), lambda n, t: (n, t, 0, 0))],
        out_specs=pl.BlockSpec((1, th, Wo, C), lambda n, t: (n, t, 0, 0)),
        compiler_params=pltpu.CompilerParams(
            dimension_semantics=("parallel", "parallel"),
            vmem_limit_bytes=_vmem_limit_bytes(cap)),
    )(s2d)
    return out


# ----------------------------------------------------------------------------
# Public forward pass mirroring layerspp.Downsample.forward (NCHW in / out).
# ----------------------------------------------------------------------------
def downsample(x_nchw, *, with_conv=False, fir=False, fir_kernel=(1, 3, 3, 1),
               conv_w=None, conv_b=None, row_tile=None):
    del fir_kernel  # only used by the FIR paths
    if fir:
        # TODO(synk): FIR (upfirdn2d-based) downsample paths (fir=True) are not
        # implemented as Pallas kernels.
        raise NotImplementedError("fir=True Downsample paths not implemented")
    if with_conv:
        y = conv3x3_stride2_downsample(x_nchw, conv_w, conv_b,
                                       row_tile=row_tile)
    else:
        y = avg_pool2x2(x_nchw, row_tile=row_tile)
    return jnp.transpose(y, (0, 3, 1, 2))            # NHWC -> NCHW


# ----------------------------------------------------------------------------
# Pure-JAX references for correctness checks.
# ----------------------------------------------------------------------------
def _ref_conv_downsample(x_nchw, w_hwio, b):
    x = jnp.transpose(x_nchw, (0, 2, 3, 1))
    xpad = jnp.pad(x, ((0, 0), (0, 1), (0, 1), (0, 0)))   # F.pad(x,(0,1,0,1))
    y = lax.conv_general_dilated(
        xpad, w_hwio, window_strides=(2, 2), padding="VALID",
        dimension_numbers=("NHWC", "HWIO", "NHWC"),
        precision=lax.Precision.HIGHEST) + b
    return jnp.transpose(y, (0, 3, 1, 2))


def _ref_avg_pool(x_nchw):
    N, C, H, W = x_nchw.shape
    return x_nchw.reshape(N, C, H // 2, 2, W // 2, 2).mean(axis=(3, 5))


if __name__ == "__main__":
    key = jax.random.PRNGKey(0)
    k_x, k_w, k_b = jax.random.split(key, 3)

    N, Cin, H, W = 2, 4, 16, 16
    Cout = 8

    x = jax.random.normal(k_x, (N, Cin, H, W), jnp.float32)                # NCHW
    conv_w = 0.1 * jax.random.normal(k_w, (3, 3, Cin, Cout), jnp.float32)  # HWIO
    conv_b = 0.1 * jax.random.normal(k_b, (Cout,), jnp.float32)

    # Path 1: fir=False, with_conv=True  (pad + 3x3 stride-2 conv).
    # Check both a multi-tile run (exercises the interior halo spec) and the
    # auto-picked (single-tile) run.
    ref_conv = _ref_conv_downsample(x, conv_w, conv_b)
    for rt in (4, None):
        out_conv = downsample(x, with_conv=True, conv_w=conv_w, conv_b=conv_b,
                              row_tile=rt)
        out_conv = jax.block_until_ready(out_conv)
        assert out_conv.shape == (N, Cout, H // 2, W // 2), out_conv.shape
        err = float(jnp.max(jnp.abs(out_conv - ref_conv)))
        assert err < 5e-3, f"conv path (row_tile={rt}) max abs err: {err}"

    # Path 2: fir=False, with_conv=False  (2x2 average pooling).
    out_pool = downsample(x, with_conv=False)
    out_pool = jax.block_until_ready(out_pool)
    assert out_pool.shape == (N, Cin, H // 2, W // 2), out_pool.shape
    ref_pool = _ref_avg_pool(x)
    err_pool = float(jnp.max(jnp.abs(out_pool - ref_pool)))
    assert err_pool < 1e-5, f"avg-pool path max abs err: {err_pool}"

    print("KERNEL_OK")
</pallas_src>

<mosaic_0001>
module attributes {stable_mosaic.version = 11 : i64} {
  func.func @_down_conv_kernel(%arg0: i32, %arg1: i32, %arg2: memref<1x4x9x16xf32, #tpu.memory_space<vmem>>, %arg3: memref<1x1x9x16xf32, #tpu.memory_space<vmem>>, %arg4: memref<2x2x16x128xf32, #tpu.memory_space<vmem>>, %arg5: memref<1x128xf32, #tpu.memory_space<vmem>>, %arg6: memref<1x4x8x128xf32, #tpu.memory_space<vmem>>, %arg7: memref<5x9x16xf32, #tpu.memory_space<vmem>>) attributes {dimension_semantics = [#tpu.dimension_semantics<parallel>, #tpu.dimension_semantics<parallel>], iteration_bounds = array<i64: 2, 2>, scalar_prefetch = 0 : i64, scratch_operands = 1 : i64, tpu.core_type = #tpu.core_type<tc>, window_params = [{transform_indices = @transform_0, window_bounds = array<i64: 1, 4, 9, 16>}, {transform_indices = @transform_1, window_bounds = array<i64: 1, 1, 9, 16>}, {pipeline_mode = #tpu.pipeline_mode<synchronous>, transform_indices = @transform_2, window_bounds = array<i64: 2, 2, 16, 128>}, {pipeline_mode = #tpu.pipeline_mode<synchronous>, transform_indices = @transform_3, window_bounds = array<i64: 1, 128>}, {transform_indices = @transform_4, window_bounds = array<i64: 1, 4, 8, 128>}]} {
    %c0 = arith.constant 0 : index
    %c0_0 = arith.constant 0 : index
    %c0_1 = arith.constant 0 : index
    %c0_2 = arith.constant 0 : index
    %0 = vector.load %arg2[%c0, %c0_0, %c0_1, %c0_2] : memref<1x4x9x16xf32, #tpu.memory_space<vmem>>, vector<1x4x9x16xf32>
    %1 = vector.shape_cast %0 : vector<1x4x9x16xf32> to vector<4x9x16xf32>
    %c0_3 = arith.constant 0 : index
    %c0_4 = arith.constant 0 : index
    %c0_5 = arith.constant 0 : index
    %2 = vector.load %arg7[%c0_3, %c0_4, %c0_5] : memref<5x9x16xf32, #tpu.memory_space<vmem>>, vector<4x9x16xf32>
    tpu.vector_store %arg7[%c0_3, %c0_4, %c0_5], %1 {strides = array<i32>} : memref<5x9x16xf32, #tpu.memory_space<vmem>>, vector<4x9x16xf32>,
    %c0_6 = arith.constant 0 : index
    %c0_7 = arith.constant 0 : index
    %c0_8 = arith.constant 0 : index
    %c0_9 = arith.constant 0 : index
    %3 = vector.load %arg3[%c0_6, %c0_7, %c0_8, %c0_9] : memref<1x1x9x16xf32, #tpu.memory_space<vmem>>, vector<1x1x9x16xf32>
    %4 = vector.shape_cast %3 : vector<1x1x9x16xf32> to vector<1x9x16xf32>
    %c4 = arith.constant 4 : index
    %c0_10 = arith.constant 0 : index
    %c0_11 = arith.constant 0 : index
    %5 = vector.load %arg7[%c4, %c0_10, %c0_11] : memref<5x9x16xf32, #tpu.memory_space<vmem>>, vector<1x9x16xf32>
    tpu.vector_store %arg7[%c4, %c0_10, %c0_11], %4 {strides = array<i32>} : memref<5x9x16xf32, #tpu.memory_space<vmem>>, vector<1x9x16xf32>,
    %cst = arith.constant 0.000000e+00 : f32
    %6 = vector.broadcast %cst : f32 to vector<32x128xf32>
    %c0_12 = arith.constant 0 : index
    %c0_13 = arith.constant 0 : index
    %c0_14 = arith.constant 0 : index
    %7 = vector.load %arg7[%c0_12, %c0_13, %c0_14] : memref<5x9x16xf32, #tpu.memory_space<vmem>>, vector<4x8x16xf32>
    %8 = vector.shape_cast %7 : vector<4x8x16xf32> to vector<32x16xf32>
    %c0_15 = arith.constant 0 : index
    %c0_16 = arith.constant 0 : index
    %c0_17 = arith.constant 0 : index
    %c0_18 = arith.constant 0 : index
    %9 = vector.load %arg4[%c0_15, %c0_16, %c0_17, %c0_18] : memref<2x2x16x128xf32, #tpu.memory_space<vmem>>, vector<1x1x16x128xf32>
    %10 = vector.shape_cast %9 : vector<1x1x16x128xf32> to vector<16x128xf32>
    %cst_19 = arith.constant dense<0.000000e+00> : vector<32x128xf32>
    %11 = tpu.matmul %8, %10, %cst_19 {dimension_numbers = #tpu.dot_dimension_numbers<[1], [0], [0], [1], [0, 0, 1, 1], [], []>} : vector<32x16xf32>, vector<16x128xf32>, vector<32x128xf32> -> vector<32x128xf32>
    %12 = arith.addf %6, %11 : vector<32x128xf32>
    %c0_20 = arith.constant 0 : index
    %c1 = arith.constant 1 : index
    %c0_21 = arith.constant 0 : index
    %13 = vector.load %arg7[%c0_20, %c1, %c0_21] : memref<5x9x16xf32, #tpu.memory_space<vmem>>, vector<4x8x16xf32>
    %14 = vector.shape_cast %13 : vector<4x8x16xf32> to vector<32x16xf32>
    %c0_22 = arith.constant 0 : index
    %c1_23 = arith.constant 1 : index
    %c0_24 = arith.constant 0 : index
    %c0_25 = arith.constant 0 : index
    %15 = vector.load %arg4[%c0_22, %c1_23, %c0_24, %c0_25] : memref<2x2x16x128xf32, #tpu.memory_space<vmem>>, vector<1x1x16x128xf32>
    %16 = vector.shape_cast %15 : vector<1x1x16x128xf32> to vector<16x128xf32>
    %cst_26 = arith.constant dense<0.000000e+00> : vector<32x128xf32>
    %17 = tpu.matmul %14, %16, %cst_26 {dimension_numbers = #tpu.dot_dimension_numbers<[1], [0], [0], [1], [0, 0, 1, 1], [], []>} : vector<32x16xf32>, vector<16x128xf32>, vector<32x128xf32> -> vector<32x128xf32>
    %18 = arith.addf %12, %17 : vector<32x128xf32>
    %c1_27 = arith.constant 1 : index
    %c0_28 = arith.constant 0 : index
    %c0_29 = arith.constant 0 : index
    %19 = vector.load %arg7[%c1_27, %c0_28, %c0_29] : memref<5x9x16xf32, #tpu.memory_space<vmem>>, vector<4x8x16xf32>
    %20 = vector.shape_cast %19 : vector<4x8x16xf32> to vector<32x16xf32>
    %c1_30 = arith.constant 1 : index
    %c0_31 = arith.constant 0 : index
    %c0_32 = arith.constant 0 : index
    %c0_33 = arith.constant 0 : index
    %21 = vector.load %arg4[%c1_30, %c0_31, %c0_32, %c0_33] : memref<2x2x16x128xf32, #tpu.memory_space<vmem>>, vector<1x1x16x128xf32>
    %22 = vector.shape_cast %21 : vector<1x1x16x128xf32> to vector<16x128xf32>
    %cst_34 = arith.constant dense<0.000000e+00> : vector<32x128xf32>
    %23 = tpu.matmul %20, %22, %cst_34 {dimension_numbers = #tpu.dot_dimension_numbers<[1], [0], [0], [1], [0, 0, 1, 1], [], []>} : vector<32x16xf32>, vector<16x128xf32>, vector<32x128xf32> -> vector<32x128xf32>
    %24 = arith.addf %18, %23 : vector<32x128xf32>
    %c1_35 = arith.constant 1 : index
    %c1_36 = arith.constant 1 : index
    %c0_37 = arith.constant 0 : index
    %25 = vector.load %arg7[%c1_35, %c1_36, %c0_37] : memref<5x9x16xf32, #tpu.memory_space<vmem>>, vector<4x8x16xf32>
    %26 = vector.shape_cast %25 : vector<4x8x16xf32> to vector<32x16xf32>
    %c1_38 = arith.constant 1 : index
    %c1_39 = arith.constant 1 : index
    %c0_40 = arith.constant 0 : index
    %c0_41 = arith.constant 0 : index
    %27 = vector.load %arg4[%c1_38, %c1_39, %c0_40, %c0_41] : memref<2x2x16x128xf32, #tpu.memory_space<vmem>>, vector<1x1x16x128xf32>
    %28 = vector.shape_cast %27 : vector<1x1x16x128xf32> to vector<16x128xf32>
    %cst_42 = arith.constant dense<0.000000e+00> : vector<32x128xf32>
    %29 = tpu.matmul %26, %28, %cst_42 {dimension_numbers = #tpu.dot_dimension_numbers<[1], [0], [0], [1], [0, 0, 1, 1], [], []>} : vector<32x16xf32>, vector<16x128xf32>, vector<32x128xf32> -> vector<32x128xf32>
    %30 = arith.addf %24, %29 : vector<32x128xf32>
    %c0_43 = arith.constant 0 : index
    %c0_44 = arith.constant 0 : index
    %31 = vector.load %arg5[%c0_43, %c0_44] : memref<1x128xf32, #tpu.memory_space<vmem>>, vector<1x128xf32>
    %32 = vector.broadcast %31 : vector<1x128xf32> to vector<32x128xf32>
    %33 = arith.addf %30, %32 : vector<32x128xf32>
    %34 = vector.shape_cast %33 : vector<32x128xf32> to vector<4x8x128xf32>
    %c0_45 = arith.constant 0 : index
    %c0_46 = arith.constant 0 : index
    %c0_47 = arith.constant 0 : index
    %c0_48 = arith.constant 0 : index
    %35 = vector.load %arg6[%c0_45, %c0_46, %c0_47, %c0_48] : memref<1x4x8x128xf32, #tpu.memory_space<vmem>>, vector<1x4x8x128xf32>
    %36 = vector.shape_cast %35 : vector<1x4x8x128xf32> to vector<4x8x128xf32>
    %37 = vector.shape_cast %34 : vector<4x8x128xf32> to vector<1x4x8x128xf32>
    tpu.vector_store %arg6[%c0_45, %c0_46, %c0_47, %c0_48], %37 {strides = array<i32>} : memref<1x4x8x128xf32, #tpu.memory_space<vmem>>, vector<1x4x8x128xf32>,
    return
  }
  func.func @transform_0(%arg0: i32, %arg1: i32) -> (i32, i32, i32, i32) {
    %c0_i32 = arith.constant 0 : i32
    %c0_i32_0 = arith.constant 0 : i32
    %c0_i32_1 = arith.constant 0 : i32
    return %arg0, %arg1, %c0_i32, %c0_i32_0 : i32, i32, i32, i32
  }
  func.func @transform_1(%arg0: i32, %arg1: i32) -> (i32, i32, i32, i32) {
    %c1_i32 = arith.constant 1 : i32
    %0 = arith.addi %arg1, %c1_i32 : i32
    %c4_i32 = arith.constant 4 : i32
    %1 = arith.muli %0, %c4_i32 : i32
    %c8_i32 = arith.constant 8 : i32
    %2 = arith.minsi %1, %c8_i32 : i32
    %c0_i32 = arith.constant 0 : i32
    %c0_i32_0 = arith.constant 0 : i32
    %c0_i32_1 = arith.constant 0 : i32
    return %arg0, %2, %c0_i32, %c0_i32_0 : i32, i32, i32, i32
  }
  func.func @transform_2(%arg0: i32, %arg1: i32) -> (i32, i32, i32, i32) {
    %c0_i32 = arith.constant 0 : i32
    %c0_i32_0 = arith.constant 0 : i32
    %c0_i32_1 = arith.constant 0 : i32
    %c0_i32_2 = arith.constant 0 : i32
    %c0_i32_3 = arith.constant 0 : i32
    return %c0_i32, %c0_i32_0, %c0_i32_1, %c0_i32_2 : i32, i32, i32, i32
  }
  func.func @transform_3(%arg0: i32, %arg1: i32) -> (i32, i32) {
    %c0_i32 = arith.constant 0 : i32
    %c0_i32_0 = arith.constant 0 : i32
    %c0_i32_1 = arith.constant 0 : i32
    return %c0_i32, %c0_i32_0 : i32, i32
  }
  func.func @transform_4(%arg0: i32, %arg1: i32) -> (i32, i32, i32, i32) {
    %c0_i32 = arith.constant 0 : i32
    %c0_i32_0 = arith.constant 0 : i32
    %c0_i32_1 = arith.constant 0 : i32
    return %arg0, %arg1, %c0_i32, %c0_i32_0 : i32, i32, i32, i32
  }
}

</mosaic_0001>

<llo_original>
// kernel: tpu_custom_call.1
$region0: #{tpu_custom_call.1}
  #allocation0 [shape = 'u32[]', space=smem, size = 0x4, offset = 0x4, fixed_abs, tag = 'smem constant byte address 0x4 - core index']
  #allocation1 [shape = 'u32[144,128]{1,0:T(1,128)}', space=vmem, size = 0x12000, scoped, tag = 'internal scratch']
  #allocation2 [shape = 'f32[5,9,16]{2,1,0:T(8,128)}', space=vmem, size = 0xa000, scoped, tag = 'scratch operand']
  %s0 = inlined_call_operand.vmem [shape: f32[2,9,9,16], index: 0, kind: input, shape index: {}]
  %s1 = inlined_call_operand.vmem [shape: f32[2,9,9,16], index: 1, kind: input, shape index: {}]
  %s2 = inlined_call_operand.vmem [shape: f32[2,2,16,128], index: 2, kind: input, shape index: {}]
  %s3 = inlined_call_operand.vmem [shape: f32[1,128], index: 3, kind: input, shape index: {}]
  %s4 = inlined_call_operand.hbm [shape: f32[2,8,8,128], index: 4, kind: output, shape index: {}]
  %s5 = sld [smem:[#allocation0]]
  $region49: #{tpu_custom_call.1} parent=0
    _
  %s7 = ssub.s32 1, %s5
  %s8 = scalar_select 0, %s7, %s5
  $region1: #{tpu_custom_call.1} parent=0
    #allocation3 [shape = 'u8[32768]{0}', space=vmem, size = 0x8000, scoped, tag = 'output window, operand 0']
    #allocation4 [shape = 's32[2]{0}', space=sflag, size = 0x8, scoped, tag = 'scoped memory for tpu_custom_call.1']
    %9 = vsyncpa [#allocation4], 0
    %s10 = scalar_lea.sflag [#allocation4], 1
    %11 = vsyncpa %s10, 0
    loop: start=0, step=1, limit=6
    $region2: #{tpu_custom_call.1} parent=1 // loop_pre_header
      _
    $region3: #{tpu_custom_call.1} parent=1 // loop_header
      %s13 = sphi 0, %s17
      %p14 = scmp.ge.s32.totalorder %s13, 6
      %s20 = sphi 0, %s32
      %s21 = sphi 0, %s28
      %s22 = sphi 0, %s20
      %s23 = sphi 0, %s21
      %s24 = sphi 0, %s22
      %s25 = sphi 0, %s23
      %s37 = sphi 0, %s39
      %s40 = sphi 0, %s37
      %s41 = sphi 0, %s40
      %s57 = sphi 0, %s41
      %s73 = sphi 0, %s75
      %s76 = sphi 0, %s73
      %s77 = sphi 0, %s76
      %s93 = sphi 0, %s77
      %s97 = sphi 0, %s97
      %s99 = sphi 0, %s97
      %s100 = sphi 0, %s99
      %s114 = sphi 0, %s100
      %s118 = sphi 0, %s118
      %s120 = sphi 0, %s118
      %s121 = sphi 0, %s120
      %s135 = sphi 0, %s121
      %s143 = sphi 0, %s145
      %s146 = sphi 0, %s143
      %s147 = sphi 0, %s146
      %s163 = sphi 0, %s147
    $region4: #{tpu_custom_call.1} parent=1 // loop_header_branch
      %16 = sbr.rel (%p14) target = $region8
    $region5: #{tpu_custom_call.1} parent=1 // loop_body
      %s18 = ssub.s32 %s13, 1
      %s19 = ssub.s32 %s13, 2
      %s26 = sadd.s32 1, %s21
      %p27 = scmp.ge.s32.totalorder %s26, 2
      %s28 = scalar_select %p27, 0, %s26
      %s29 = sadd.s32 1, %s20
      %s30 = scalar_select %p27, %s29, %s20
      %p31 = scmp.ge.s32.totalorder %s30, 2
      %s32 = scalar_select %p31, 0, %s30
      %s33 = ssub.s32 %s20, %s32
      %s34 = ssub.s32 %s21, %s28
      %s35 = sor.u32 %s33, %s34
      %p36 = scmp.eq.s32.totalorder %s35, 0
      %s38 = sadd.s32 %s37, 1
      %s39 = scalar_select %p36, %s37, %s38
      %p42 = pneg %p36
      %p43 = scmp.eq.s32.totalorder %s13, 3
      %p44 = por %p42, %p43
      %p45 = scmp.ne.s32.totalorder %s37, %s40
      %p46 = scmp.eq.s32.totalorder %s13, 0
      %p47 = por %p45, %p46
      %p48 = scmp.ne.s32.totalorder %s37, %s40
      %p49 = scmp.eq.s32.totalorder %s18, 3
      %p50 = por %p48, %p49
      %p51 = scmp.ne.s32.totalorder %s40, %s41
      %p52 = scmp.eq.s32.totalorder %s18, 0
      %p53 = por %p51, %p52
      %p54 = scmp.ne.s32.totalorder %s40, %s41
      %p55 = scmp.eq.s32.totalorder %s19, 3
      %p56 = por %p54, %p55
      %p58 = scmp.ne.s32.totalorder %s41, %s57
      %p59 = scmp.eq.s32.totalorder %s19, 0
      %p60 = por %p58, %p59
      %s61 = sadd.s32 %s21, 1
      %s62 = smul.u32 %s61, 4
      %p63 = scmp.lt.s32.totalorder %s62, 8
      %s64 = scalar_select %p63, %s62, 8
      %s65 = sadd.s32 %s28, 1
      %s66 = smul.u32 %s65, 4
      %p67 = scmp.lt.s32.totalorder %s66, 8
      %s68 = scalar_select %p67, %s66, 8
      %s69 = ssub.s32 %s20, %s32
      %s70 = ssub.s32 %s64, %s68
      %s71 = sor.u32 %s69, %s70
      %p72 = scmp.eq.s32.totalorder %s71, 0
      %s74 = sadd.s32 %s73, 1
      %s75 = scalar_select %p72, %s73, %s74
      %p78 = pneg %p72
      %p79 = scmp.eq.s32.totalorder %s13, 3
      %p80 = por %p78, %p79
      %p81 = scmp.ne.s32.totalorder %s73, %s76
      %p82 = scmp.eq.s32.totalorder %s13, 0
      %p83 = por %p81, %p82
      %p84 = scmp.ne.s32.totalorder %s73, %s76
      %p85 = scmp.eq.s32.totalorder %s18, 3
      %p86 = por %p84, %p85
      %p87 = scmp.ne.s32.totalorder %s76, %s77
      %p88 = scmp.eq.s32.totalorder %s18, 0
      %p89 = por %p87, %p88
      %p90 = scmp.ne.s32.totalorder %s76, %s77
      %p91 = scmp.eq.s32.totalorder %s19, 3
      %p92 = por %p90, %p91
      %p94 = scmp.ne.s32.totalorder %s77, %s93
      %p95 = scmp.eq.s32.totalorder %s19, 0
      %p96 = por %p94, %p95
      %s98 = sadd.s32 %s97, 1
      %p101 = scmp.eq.s32.totalorder %s13, 3
      %p102 = scmp.ne.s32.totalorder %s97, %s99
      %p103 = scmp.eq.s32.totalorder %s13, 0
      %p104 = por %p102, %p103
      %p105 = scmp.ne.s32.totalorder %s97, %s99
      %p106 = scmp.eq.s32.totalorder %s18, 3
      %p107 = por %p105, %p106
      %p108 = scmp.ne.s32.totalorder %s99, %s100
      %p109 = scmp.eq.s32.totalorder %s18, 0
      %p110 = por %p108, %p109
      %p111 = scmp.ne.s32.totalorder %s99, %s100
      %p112 = scmp.eq.s32.totalorder %s19, 3
      %p113 = por %p111, %p112
      %p115 = scmp.ne.s32.totalorder %s100, %s114
      %p116 = scmp.eq.s32.totalorder %s19, 0
      %p117 = por %p115, %p116
      %s119 = sadd.s32 %s118, 1
      %p122 = scmp.eq.s32.totalorder %s13, 3
      %p123 = scmp.ne.s32.totalorder %s118, %s120
      %p124 = scmp.eq.s32.totalorder %s13, 0
      %p125 = por %p123, %p124
      %p126 = scmp.ne.s32.totalorder %s118, %s120
      %p127 = scmp.eq.s32.totalorder %s18, 3
      %p128 = por %p126, %p127
      %p129 = scmp.ne.s32.totalorder %s120, %s121
      %p130 = scmp.eq.s32.totalorder %s18, 0
      %p131 = por %p129, %p130
      %p132 = scmp.ne.s32.totalorder %s120, %s121
      %p133 = scmp.eq.s32.totalorder %s19, 3
      %p134 = por %p132, %p133
      %p136 = scmp.ne.s32.totalorder %s121, %s135
      %p137 = scmp.eq.s32.totalorder %s19, 0
      %p138 = por %p136, %p137
      %s139 = ssub.s32 %s20, %s32
      %s140 = ssub.s32 %s21, %s28
      %s141 = sor.u32 %s139, %s140
      %p142 = scmp.eq.s32.totalorder %s141, 0
      %s144 = sadd.s32 %s143, 1
      %s145 = scalar_select %p142, %s143, %s144
      %p148 = pneg %p142
      %p149 = scmp.eq.s32.totalorder %s13, 3
      %p150 = por %p148, %p149
      %p151 = scmp.ne.s32.totalorder %s143, %s146
      %p152 = scmp.eq.s32.totalorder %s13, 0
      %p153 = por %p151, %p152
      %p154 = scmp.ne.s32.totalorder %s143, %s146
      %p155 = scmp.eq.s32.totalorder %s18, 3
      %p156 = por %p154, %p155
      %p157 = scmp.ne.s32.totalorder %s146, %s147
      %p158 = scmp.eq.s32.totalorder %s18, 0
      %p159 = por %p157, %p158
      %p160 = scmp.ne.s32.totalorder %s146, %s147
      %p161 = scmp.eq.s32.totalorder %s19, 3
      %p162 = por %p160, %p161
      %p164 = scmp.ne.s32.totalorder %s147, %s163
      %p165 = scmp.eq.s32.totalorder %s19, 0
      %p166 = por %p164, %p165
      %p167 = scmp.le.s32.totalorder 1, %s13
      %p168 = scmp.lt.s32.totalorder %s13, 5
      %p169 = pnand %p167, %p168
      %p170 = pneg %p169
      // Predicated region
      $region9: #{tpu_custom_call.1} parent=5 // pred_check
        _
      $region10: #{tpu_custom_call.1} parent=5 // pred_check_branch
        %172 = sbr.rel (%p169) target = $region12
      $region11: #{tpu_custom_call.1} parent=5 // pred_region
        %s173 = ssub.s32 %s13, 1
        // Predicated region
        $region13: #{tpu_custom_call.1} parent=11 // pred_check
          %p174 = pneg %p110
        $region14: #{tpu_custom_call.1} parent=11 // pred_check_branch
          %176 = sbr.rel (%p174) target = $region16
        $region15: #{tpu_custom_call.1} parent=11 // pred_region
          _
        $region16: #{tpu_custom_call.1} parent=11 // pred_fallthru
          _
        // Predicated region
        $region17: #{tpu_custom_call.1} parent=11 // pred_check
          %p177 = pneg %p131
        $region18: #{tpu_custom_call.1} parent=11 // pred_check_branch
          %179 = sbr.rel (%p177) target = $region20
        $region19: #{tpu_custom_call.1} parent=11 // pred_region
          _
        $region20: #{tpu_custom_call.1} parent=11 // pred_fallthru
          _
      $region12: #{tpu_custom_call.1} parent=5 // pred_fallthru
        _
      %p180 = scmp.lt.s32.totalorder %s13, 4
      // Predicated region
      $region21: #{tpu_custom_call.1} parent=5 // pred_check
        %p181 = pneg %p180
      $region22: #{tpu_custom_call.1} parent=5 // pred_check_branch
        %183 = sbr.rel (%p181) target = $region24
      $region23: #{tpu_custom_call.1} parent=5 // pred_region
        // Predicated region
        $region25: #{tpu_custom_call.1} parent=23 // pred_check
          %p184 = pneg %p47
        $region26: #{tpu_custom_call.1} parent=23 // pred_check_branch
          %186 = sbr.rel (%p184) target = $region28
        $region27: #{tpu_custom_call.1} parent=23 // pred_region
          %s187 = smul.u32 4, %s21
          %s188 = ssub.s32 9, %s187
          %p189 = scmp.lt.s32.totalorder %s188, 4
          %s190 = scalar_select %p189, %s188, 4
          %s191 = smul.u32 128, %s190
          %s192 = smul.u32 %s191, 2
          %p193 = scmp.lt.s32.totalorder %s20, 1
          %s194 = scalar_select %p193, %s20, 1
          %p195 = scmp.lt.s32.totalorder %s187, 8
          %s196 = scalar_select %p195, %s187, 8
          %s197 = smul.addr %s196, 2
          %s198 = smul.addr %s194, 18
          %s199 = sadd.s32 %s197, %s198
          %s200 = smul.addr %s199, 8
          %s201 = scalar_lea.vmem %s0, %s200
          %s202 = smul.u32 4, %s21
          %s203 = ssub.s32 9, %s202
          %p204 = scmp.lt.s32.totalorder %s203, 4
          %s205 = scalar_select %p204, %s203, 4
          %s206 = smul.u32 128, %s205
          %s207 = smul.u32 %s206, 2
        $region28: #{tpu_custom_call.1} parent=23 // pred_fallthru
          _
        // Predicated region
        $region29: #{tpu_custom_call.1} parent=23 // pred_check
          %p208 = pneg %p83
        $region30: #{tpu_custom_call.1} parent=23 // pred_check_branch
          %210 = sbr.rel (%p208) target = $region32
        $region31: #{tpu_custom_call.1} parent=23 // pred_region
          %s211 = sadd.s32 %s21, 1
          %s212 = smul.u32 %s211, 4
          %p213 = scmp.lt.s32.totalorder %s212, 8
          %s214 = scalar_select %p213, %s212, 8
          %p215 = scmp.lt.s32.totalorder %s20, 1
          %s216 = scalar_select %p215, %s20, 1
          %p217 = scmp.lt.s32.totalorder %s214, 8
          %s218 = scalar_select %p217, %s214, 8
          %s219 = smul.addr %s218, 2
          %s220 = smul.addr %s216, 18
          %s221 = sadd.s32 %s219, %s220
          %s222 = smul.addr %s221, 8
          %s223 = scalar_lea.vmem %s1, %s222
          %s224 = sadd.s32 %s21, 1
          %s225 = smul.u32 %s224, 4
          %p226 = scmp.lt.s32.totalorder %s225, 8
          %s227 = scalar_select %p226, %s225, 8
        $region32: #{tpu_custom_call.1} parent=23 // pred_fallthru
          _
      $region24: #{tpu_custom_call.1} parent=5 // pred_fallthru
        _
      %p228 = scmp.le.s32.totalorder 1, %s13
      %p229 = scmp.lt.s32.totalorder %s13, 5
      %p230 = pnand %p228, %p229
      %p231 = pneg %p230
      // Predicated region
      $region33: #{tpu_custom_call.1} parent=5 // pred_check
        _
      $region34: #{tpu_custom_call.1} parent=5 // pred_check_branch
        %233 = sbr.rel (%p230) target = $region36
      $region35: #{tpu_custom_call.1} parent=5 // pred_region
        %s234 = ssub.s32 %s13, 1
        %s235 = smul.u32 4, %s23
        %s236 = ssub.s32 9, %s235
        %p237 = scmp.lt.s32.totalorder %s236, 4
        %s238 = scalar_select %p237, %s236, 4
        %s239 = smul.u32 128, %s238
        %s240 = smul.u32 %s239, 2
        %p241 = scmp.lt.s32.totalorder %s22, 1
        %s242 = scalar_select %p241, %s22, 1
        %p243 = scmp.lt.s32.totalorder %s235, 8
        %s244 = scalar_select %p243, %s235, 8
        %s245 = smul.addr %s244, 2
        %s246 = smul.addr %s242, 18
        %s247 = sadd.s32 %s245, %s246
        %s248 = smul.addr %s247, 8
        %s249 = scalar_lea.vmem %s0, %s248
        %p250 = pneg %p53
        %p251 = pneg %p50
        %s252 = sadd.s32 %s23, 1
        %s253 = smul.u32 %s252, 4
        %p254 = scmp.lt.s32.totalorder %s253, 8
        %s255 = scalar_select %p254, %s253, 8
        %p256 = scmp.lt.s32.totalorder %s22, 1
        %s257 = scalar_select %p256, %s22, 1
        %p258 = scmp.lt.s32.totalorder %s255, 8
        %s259 = scalar_select %p258, %s255, 8
        %s260 = smul.addr %s259, 2
        %s261 = smul.addr %s257, 18
        %s262 = sadd.s32 %s260, %s261
        %s263 = smul.addr %s262, 8
        %s264 = scalar_lea.vmem %s1, %s263
        %p265 = pneg %p89
        %p266 = pneg %p86
        %p267 = pneg %p110
        %p268 = pneg %p107
        %p269 = pneg %p131
        %p270 = pneg %p128
        %p271 = pneg %p159
        %p272 = pneg %p156
        %s273 = sand.u32 %s146, 1
        %s274 = scalar_lea.sflag [#allocation4], %s273
        %s275 = sand.u32 %s146, 1
        %s276 = smul.addr %s275, 32
        %s277 = scalar_lea.vmem [#allocation3], %s276
        %s278 = smul.u32 4, %s23
        %s279 = ssub.s32 9, %s278
        %p280 = scmp.lt.s32.totalorder %s279, 4
        %s281 = scalar_select %p280, %s279, 4
        %s282 = smul.u32 128, %s281
        %s283 = smul.u32 %s282, 2
        %p284 = scmp.lt.s32.totalorder %s22, 1
        %s285 = scalar_select %p284, %s22, 1
        %p286 = scmp.lt.s32.totalorder %s278, 8
        %s287 = scalar_select %p286, %s278, 8
        %s288 = smul.addr %s287, 2
        %s289 = smul.addr %s285, 18
        %s290 = sadd.s32 %s288, %s289
        %s291 = smul.addr %s290, 8
        %s292 = scalar_lea.vmem %s0, %s291
        %s293 = smul.u32 4, %s23
        %s294 = ssub.s32 9, %s293
        %p295 = scmp.lt.s32.totalorder %s294, 4
        %s296 = scalar_select %p295, %s294, 4
        %s297 = smul.u32 128, %s296
        %s298 = smul.u32 %s297, 2
        %s299 = sadd.s32 %s23, 1
        %s300 = smul.u32 %s299, 4
        %p301 = scmp.lt.s32.totalorder %s300, 8
        %s302 = scalar_select %p301, %s300, 8
        %p303 = scmp.lt.s32.totalorder %s22, 1
        %s304 = scalar_select %p303, %s22, 1
        %p305 = scmp.lt.s32.totalorder %s302, 8
        %s306 = scalar_select %p305, %s302, 8
        %s307 = smul.addr %s306, 2
        %s308 = smul.addr %s304, 18
        %s309 = sadd.s32 %s307, %s308
        %s310 = smul.addr %s309, 8
        %s311 = scalar_lea.vmem %s1, %s310
        %s312 = sadd.s32 %s23, 1
        %s313 = smul.u32 %s312, 4
        %p314 = scmp.lt.s32.totalorder %s313, 8
        %s315 = scalar_select %p314, %s313, 8
        %s316 = smul.u32 4, %s23
        %v317 = vld [vmem:[%s292] sm:$0xff]
        %v318 = vld [vmem:[%s292 + $0x8] sm:$0x1]
        %v319 = vld [vmem:[%s292 + $0x10] sm:$0xff]
        %v320 = vld [vmem:[%s292 + $0x18] sm:$0x1]
        %v321 = vld [vmem:[%s292 + $0x20] sm:$0xff]
        %v322 = vld [vmem:[%s292 + $0x28] sm:$0x1]
        %v323 = vld [vmem:[%s292 + $0x30] sm:$0xff]
        %v324 = vld [vmem:[%s292 + $0x38] sm:$0x1]
        %vm325 = vcmask 130048
        %326 = vst.msk [vmem:[#allocation2] sm:$0xff] %vm325, %v317
        %vm327 = vcmask 122880
        %328 = vst.msk [vmem:[#allocation2 + $0x8] sm:$0x1] %vm327, %v318
        %329 = vst.msk [vmem:[#allocation2 + $0x10] sm:$0xff] %vm325, %v319
        %330 = vst.msk [vmem:[#allocation2 + $0x18] sm:$0x1] %vm327, %v320
        %331 = vst.msk [vmem:[#allocation2 + $0x20] sm:$0xff] %vm325, %v321
        %332 = vst.msk [vmem:[#allocation2 + $0x28] sm:$0x1] %vm327, %v322
        %333 = vst.msk [vmem:[#allocation2 + $0x30] sm:$0xff] %vm325, %v323
        %334 = vst.msk [vmem:[#allocation2 + $0x38] sm:$0x1] %vm327, %v324
        %v335 = vld [vmem:[%s311] sm:$0xff]
        %v336 = vld [vmem:[%s311 + $0x8] sm:$0x1]
        %s337 = scalar_lea.vmem [#allocation2], 64
        %338 = vst.msk [vmem:[%s337] sm:$0xff] %vm325, %v335
        %339 = vst.msk [vmem:[%s337 + $0x8] sm:$0x1] %vm327, %v336
        %v340 = vld [vmem:[#allocation2] sm:$0xff]
        %v341 = vld [vmem:[#allocation2 + $0x10] sm:$0xff]
        %v342 = vld [vmem:[#allocation2 + $0x20] sm:$0xff]
        %v343 = vld [vmem:[#allocation2 + $0x30] sm:$0xff]
        %v344 = vld [vmem:[%s2] sm:$0xff]
        %v345 = vld [vmem:[%s2 + $0x8] sm:$0xff]
        %v346 = vld [vmem:[#allocation2 + $0x1] sm:$0xff]
        %v347 = vld [vmem:[#allocation2 + $0x11] sm:$0xff]
        %v348 = vld [vmem:[#allocation2 + $0x21] sm:$0xff]
        %v349 = vld [vmem:[#allocation2 + $0x31] sm:$0xff]
        %s350 = scalar_lea.vmem %s2, 16
        %v351 = vld [vmem:[%s350] sm:$0xff]
        %v352 = vld [vmem:[%s350 + $0x8] sm:$0xff]
        %v354 = vsel %vm325, %v346, 0
        %v357 = vsel %vm325, %v347, 0
        %v360 = vsel %vm325, %v348, 0
        %v363 = vsel %vm325, %v349, 0
        %365 = vmatprep.subr.mxu0 0.0
        %366 = vmatpush1.msra.mxu0 %v351
        %367 = vmatprep.subr.mxu0 0.0
        %368 = vmatpush1.msra.mxu0 %v352
        %369 = vmatprep.subr.mxu0 0.0
        %370 = vmatpush1.msra.mxu0 0.0
        %371 = vmatprep.subr.mxu0 0.0
        %372 = vmatpush1.msra.mxu0 0.0
        %373 = vmatprep.subr.mxu0 0.0
        %374 = vmatpush1.msra.mxu0 0.0
        %375 = vmatprep.subr.mxu0 0.0
        %376 = vmatpush1.msra.mxu0 0.0
        %377 = vmatprep.subr.mxu0 0.0
        %378 = vmatpush1.msra.mxu0 0.0
        %379 = vmatprep.subr.mxu0 0.0
        %380 = vmatpush1.msra.mxu0 0.0
        %381 = vmatprep.subr.mxu0 0.0
        %382 = vmatpush1.msra.mxu0 0.0
        %383 = vmatprep.subr.mxu0 0.0
        %384 = vmatpush1.msra.mxu0 0.0
        %385 = vmatprep.subr.mxu0 0.0
        %386 = vmatpush1.msra.mxu0 0.0
        %387 = vmatprep.subr.mxu0 0.0
        %388 = vmatpush1.msra.mxu0 0.0
        %389 = vmatprep.subr.mxu0 0.0
        %390 = vmatpush1.msra.mxu0 0.0
        %391 = vmatprep.subr.mxu0 0.0
        %392 = vmatpush1.msra.mxu0 0.0
        %393 = vmatprep.subr.mxu0 0.0
        %394 = vmatpush1.msra.mxu0 0.0
        %395 = vmatprep.subr.mxu0 0.0
        %396 = vmatpush1.msra.mxu0 0.0
        %397 = vmatprep.subr.mxu0 0.0
        %398 = vmatpush1.msra.mxu0 0.0
        %399 = vmatprep.subr.mxu0 0.0
        %400 = vmatpush1.msra.mxu0 0.0
        %401 = vmatprep.subr.mxu0 0.0
        %402 = vmatpush1.msra.mxu0 0.0
        %403 = vmatprep.subr.mxu0 0.0
        %404 = vmatpush1.msra.mxu0 0.0
        %405 = vmatprep.subr.mxu0 0.0
        %406 = vmatpush1.msra.mxu0 0.0
        %407 = vmatprep.subr.mxu0 0.0
        %408 = vmatpush1.msra.mxu0 0.0
        %409 = vmatprep.subr.mxu0 0.0
        %410 = vmatpush1.msra.mxu0 0.0
        %411 = vmatprep.subr.mxu0 0.0
        %412 = vmatpush1.msra.mxu0 0.0
        %413 = vmatprep.subr.mxu0 0.0
        %414 = vmatpush1.msra.mxu0 0.0
        %415 = vmatprep.subr.mxu0 0.0
        %416 = vmatpush1.msra.mxu0 0.0
        %417 = vmatprep.subr.mxu0 0.0
        %418 = vmatpush1.msra.mxu0 0.0
        %419 = vmatprep.subr.mxu0 0.0
        %420 = vmatpush1.msra.mxu0 0.0
        %421 = vmatprep.subr.mxu0 0.0
        %422 = vmatpush1.msra.mxu0 0.0
        %423 = vmatprep.subr.mxu0 0.0
        %424 = vmatpush1.msra.mxu0 0.0
        %425 = vmatprep.subr.mxu0 0.0
        %426 = vmatpush1.msra.mxu0 0.0
        %427 = vmatprep.subr.mxu0 0.0
        %428 = vmatpush1.msra.mxu0 0.0
        %429 = vmatprep.mubr.f32.mxu0 0.0
        %430 = vmatmul.mubr.f32.gmra.mrb[0].mxu0 %v354
        %v431 = vpop.f32.mrb[0].mxu0
        %v432 = vadd.f32 0.0, %v431
        %v433 = vpop.f32.mrb[0].mxu0
        %434 = vmatprep.mubr.f32.mxu0 0.0
        %435 = vmatmul.mubr.f32.gmra.mrb[0].mxu0 %v357
        %v436 = vpop.f32.mrb[0].mxu0
        %v437 = vadd.f32 0.0, %v436
        %v438 = vpop.f32.mrb[0].mxu0
        %439 = vmatprep.mubr.f32.mxu0 0.0
        %440 = vmatmul.mubr.f32.gmra.mrb[0].mxu0 %v360
        %v441 = vpop.f32.mrb[0].mxu0
        %v442 = vadd.f32 0.0, %v441
        %v443 = vpop.f32.mrb[0].mxu0
        %444 = vmatprep.mubr.f32.mxu0 0.0
        %445 = vmatmul.mubr.f32.gmra.mrb[0].mxu0 %v363
        %v446 = vpop.f32.mrb[0].mxu0
        %v447 = vadd.f32 0.0, %v446
        %v448 = vpop.f32.mrb[0].mxu0
        %449 = vdwg.mxu0
        %v451 = vsel %vm325, %v340, 0
        %v454 = vsel %vm325, %v341, 0
        %v457 = vsel %vm325, %v342, 0
        %v460 = vsel %vm325, %v343, 0
        %462 = vmatprep.subr.mxu0 0.0
        %463 = vmatpush1.msra.mxu0 %v344
        %464 = vmatprep.subr.mxu0 0.0
        %465 = vmatpush1.msra.mxu0 %v345
        %466 = vmatprep.subr.mxu0 0.0
        %467 = vmatpush1.msra.mxu0 0.0
        %468 = vmatprep.subr.mxu0 0.0
        %469 = vmatpush1.msra.mxu0 0.0
        %470 = vmatprep.subr.mxu0 0.0
        %471 = vmatpush1.msra.mxu0 0.0
        %472 = vmatprep.subr.mxu0 0.0
        %473 = vmatpush1.msra.mxu0 0.0
        %474 = vmatprep.subr.mxu0 0.0
        %475 = vmatpush1.msra.mxu0 0.0
        %476 = vmatprep.subr.mxu0 0.0
        %477 = vmatpush1.msra.mxu0 0.0
        %478 = vmatprep.subr.mxu0 0.0
        %479 = vmatpush1.msra.mxu0 0.0
        %480 = vmatprep.subr.mxu0 0.0
        %481 = vmatpush1.msra.mxu0 0.0
        %482 = vmatprep.subr.mxu0 0.0
        %483 = vmatpush1.msra.mxu0 0.0
        %484 = vmatprep.subr.mxu0 0.0
        %485 = vmatpush1.msra.mxu0 0.0
        %486 = vmatprep.subr.mxu0 0.0
        %487 = vmatpush1.msra.mxu0 0.0
        %488 = vmatprep.subr.mxu0 0.0
        %489 = vmatpush1.msra.mxu0 0.0
        %490 = vmatprep.subr.mxu0 0.0
        %491 = vmatpush1.msra.mxu0 0.0
        %492 = vmatprep.subr.mxu0 0.0
        %493 = vmatpush1.msra.mxu0 0.0
        %494 = vmatprep.subr.mxu0 0.0
        %495 = vmatpush1.msra.mxu0 0.0
        %496 = vmatprep.subr.mxu0 0.0
        %497 = vmatpush1.msra.mxu0 0.0
        %498 = vmatprep.subr.mxu0 0.0
        %499 = vmatpush1.msra.mxu0 0.0
        %500 = vmatprep.subr.mxu0 0.0
        %501 = vmatpush1.msra.mxu0 0.0
        %502 = vmatprep.subr.mxu0 0.0
        %503 = vmatpush1.msra.mxu0 0.0
        %504 = vmatprep.subr.mxu0 0.0
        %505 = vmatpush1.msra.mxu0 0.0
        %506 = vmatprep.subr.mxu0 0.0
        %507 = vmatpush1.msra.mxu0 0.0
        %508 = vmatprep.subr.mxu0 0.0
        %509 = vmatpush1.msra.mxu0 0.0
        %510 = vmatprep.subr.mxu0 0.0
        %511 = vmatpush1.msra.mxu0 0.0
        %512 = vmatprep.subr.mxu0 0.0
        %513 = vmatpush1.msra.mxu0 0.0
        %514 = vmatprep.subr.mxu0 0.0
        %515 = vmatpush1.msra.mxu0 0.0
        %516 = vmatprep.subr.mxu0 0.0
        %517 = vmatpush1.msra.mxu0 0.0
        %518 = vmatprep.subr.mxu0 0.0
        %519 = vmatpush1.msra.mxu0 0.0
        %520 = vmatprep.subr.mxu0 0.0
        %521 = vmatpush1.msra.mxu0 0.0
        %522 = vmatprep.subr.mxu0 0.0
        %523 = vmatpush1.msra.mxu0 0.0
        %524 = vmatprep.subr.mxu0 0.0
        %525 = vmatpush1.msra.mxu0 0.0
        %526 = vmatprep.mubr.f32.mxu0 0.0
        %527 = vmatmul.mubr.f32.gmra.mrb[0].mxu0 %v451
        %v528 = vpop.f32.mrb[0].mxu0
        %v529 = vadd.f32 %v432, %v528
        %v530 = vpop.f32.mrb[0].mxu0
        %531 = vmatprep.mubr.f32.mxu0 0.0
        %532 = vmatmul.mubr.f32.gmra.mrb[0].mxu0 %v454
        %v533 = vpop.f32.mrb[0].mxu0
        %v534 = vadd.f32 %v437, %v533
        %v535 = vpop.f32.mrb[0].mxu0
        %536 = vmatprep.mubr.f32.mxu0 0.0
        %537 = vmatmul.mubr.f32.gmra.mrb[0].mxu0 %v457
        %v538 = vpop.f32.mrb[0].mxu0
        %v539 = vadd.f32 %v442, %v538
        %v540 = vpop.f32.mrb[0].mxu0
        %541 = vmatprep.mubr.f32.mxu0 0.0
        %542 = vmatmul.mubr.f32.gmra.mrb[0].mxu0 %v460
        %v543 = vpop.f32.mrb[0].mxu0
        %v544 = vadd.f32 %v447, %v543
        %v545 = vpop.f32.mrb[0].mxu0
        %546 = vdwg.mxu0
        %s547 = scalar_lea.vmem [#allocation2], 16
        %v548 = vld [vmem:[%s547] sm:$0xff]
        %v549 = vld [vmem:[%s547 + $0x10] sm:$0xff]
        %v550 = vld [vmem:[%s547 + $0x20] sm:$0xff]
        %v551 = vld [vmem:[%s547 + $0x30] sm:$0xff]
        %s552 = scalar_lea.vmem %s2, 32
        %v553 = vld [vmem:[%s552] sm:$0xff]
        %v554 = vld [vmem:[%s552 + $0x8] sm:$0xff]
        %v556 = vsel %vm325, %v548, 0
        %v559 = vsel %vm325, %v549, 0
        %v562 = vsel %vm325, %v550, 0
        %v565 = vsel %vm325, %v551, 0
        %567 = vmatprep.subr.mxu0 0.0
        %568 = vmatpush1.msra.mxu0 %v553
        %569 = vmatprep.subr.mxu0 0.0
        %570 = vmatpush1.msra.mxu0 %v554
        %571 = vmatprep.subr.mxu0 0.0
        %572 = vmatpush1.msra.mxu0 0.0
        %573 = vmatprep.subr.mxu0 0.0
        %574 = vmatpush1.msra.mxu0 0.0
        %575 = vmatprep.subr.mxu0 0.0
        %576 = vmatpush1.msra.mxu0 0.0
        %577 = vmatprep.subr.mxu0 0.0
        %578 = vmatpush1.msra.mxu0 0.0
        %579 = vmatprep.subr.mxu0 0.0
        %580 = vmatpush1.msra.mxu0 0.0
        %581 = vmatprep.subr.mxu0 0.0
        %582 = vmatpush1.msra.mxu0 0.0
        %583 = vmatprep.subr.mxu0 0.0
        %584 = vmatpush1.msra.mxu0 0.0
        %585 = vmatprep.subr.mxu0 0.0
        %586 = vmatpush1.msra.mxu0 0.0
        %587 = vmatprep.subr.mxu0 0.0
        %588 = vmatpush1.msra.mxu0 0.0
        %589 = vmatprep.subr.mxu0 0.0
        %590 = vmatpush1.msra.mxu0 0.0
        %591 = vmatprep.subr.mxu0 0.0
        %592 = vmatpush1.msra.mxu0 0.0
        %593 = vmatprep.subr.mxu0 0.0
        %594 = vmatpush1.msra.mxu0 0.0
        %595 = vmatprep.subr.mxu0 0.0
        %596 = vmatpush1.msra.mxu0 0.0
        %597 = vmatprep.subr.mxu0 0.0
        %598 = vmatpush1.msra.mxu0 0.0
        %599 = vmatprep.subr.mxu0 0.0
        %600 = vmatpush1.msra.mxu0 0.0
        %601 = vmatprep.subr.mxu0 0.0
        %602 = vmatpush1.msra.mxu0 0.0
        %603 = vmatprep.subr.mxu0 0.0
        %604 = vmatpush1.msra.mxu0 0.0
        %605 = vmatprep.subr.mxu0 0.0
        %606 = vmatpush1.msra.mxu0 0.0
        %607 = vmatprep.subr.mxu0 0.0
        %608 = vmatpush1.msra.mxu0 0.0
        %609 = vmatprep.subr.mxu0 0.0
        %610 = vmatpush1.msra.mxu0 0.0
        %611 = vmatprep.subr.mxu0 0.0
        %612 = vmatpush1.msra.mxu0 0.0
        %613 = vmatprep.subr.mxu0 0.0
        %614 = vmatpush1.msra.mxu0 0.0
        %615 = vmatprep.subr.mxu0 0.0
        %616 = vmatpush1.msra.mxu0 0.0
        %617 = vmatprep.subr.mxu0 0.0
        %618 = vmatpush1.msra.mxu0 0.0
        %619 = vmatprep.subr.mxu0 0.0
        %620 = vmatpush1.msra.mxu0 0.0
        %621 = vmatprep.subr.mxu0 0.0
        %622 = vmatpush1.msra.mxu0 0.0
        %623 = vmatprep.subr.mxu0 0.0
        %624 = vmatpush1.msra.mxu0 0.0
        %625 = vmatprep.subr.mxu0 0.0
        %626 = vmatpush1.msra.mxu0 0.0
        %627 = vmatprep.subr.mxu0 0.0
        %628 = vmatpush1.msra.mxu0 0.0
        %629 = vmatprep.subr.mxu0 0.0
        %630 = vmatpush1.msra.mxu0 0.0
        %631 = vmatprep.mubr.f32.mxu0 0.0
        %632 = vmatmul.mubr.f32.gmra.mrb[0].mxu0 %v556
        %v633 = vpop.f32.mrb[0].mxu0
        %v634 = vadd.f32 0.0, %v633
        %v635 = vpop.f32.mrb[0].mxu0
        %636 = vmatprep.mubr.f32.mxu0 0.0
        %637 = vmatmul.mubr.f32.gmra.mrb[0].mxu0 %v559
        %v638 = vpop.f32.mrb[0].mxu0
        %v639 = vadd.f32 0.0, %v638
        %v640 = vpop.f32.mrb[0].mxu0
        %641 = vmatprep.mubr.f32.mxu0 0.0
        %642 = vmatmul.mubr.f32.gmra.mrb[0].mxu0 %v562
        %v643 = vpop.f32.mrb[0].mxu0
        %v644 = vadd.f32 0.0, %v643
        %v645 = vpop.f32.mrb[0].mxu0
        %646 = vmatprep.mubr.f32.mxu0 0.0
        %647 = vmatmul.mubr.f32.gmra.mrb[0].mxu0 %v565
        %v648 = vpop.f32.mrb[0].mxu0
        %v649 = vadd.f32 0.0, %v648
        %v650 = vpop.f32.mrb[0].mxu0
        %651 = vdwg.mxu0
        %v652 = vadd.f32 %v529, %v634
        %v653 = vadd.f32 %v534, %v639
        %v654 = vadd.f32 %v539, %v644
        %v655 = vadd.f32 %v544, %v649
        %v656 = vld [vmem:[%s547 + $0x1] sm:$0xff]
        %v657 = vld [vmem:[%s547 + $0x11] sm:$0xff]
        %v658 = vld [vmem:[%s547 + $0x21] sm:$0xff]
        %v659 = vld [vmem:[%s547 + $0x31] sm:$0xff]
        %s660 = scalar_lea.vmem %s2, 48
        %v661 = vld [vmem:[%s660] sm:$0xff]
        %v662 = vld [vmem:[%s660 + $0x8] sm:$0xff]
        %v664 = vsel %vm325, %v656, 0
        %v667 = vsel %vm325, %v657, 0
        %v670 = vsel %vm325, %v658, 0
        %v673 = vsel %vm325, %v659, 0
        %675 = vmatprep.subr.mxu0 0.0
        %676 = vmatpush1.msra.mxu0 %v661
        %677 = vmatprep.subr.mxu0 0.0
        %678 = vmatpush1.msra.mxu0 %v662
        %679 = vmatprep.subr.mxu0 0.0
        %680 = vmatpush1.msra.mxu0 0.0
        %681 = vmatprep.subr.mxu0 0.0
        %682 = vmatpush1.msra.mxu0 0.0
        %683 = vmatprep.subr.mxu0 0.0
        %684 = vmatpush1.msra.mxu0 0.0
        %685 = vmatprep.subr.mxu0 0.0
        %686 = vmatpush1.msra.mxu0 0.0
        %687 = vmatprep.subr.mxu0 0.0
        %688 = vmatpush1.msra.mxu0 0.0
        %689 = vmatprep.subr.mxu0 0.0
        %690 = vmatpush1.msra.mxu0 0.0
        %691 = vmatprep.subr.mxu0 0.0
        %692 = vmatpush1.msra.mxu0 0.0
        %693 = vmatprep.subr.mxu0 0.0
        %694 = vmatpush1.msra.mxu0 0.0
        %695 = vmatprep.subr.mxu0 0.0
        %696 = vmatpush1.msra.mxu0 0.0
        %697 = vmatprep.subr.mxu0 0.0
        %698 = vmatpush1.msra.mxu0 0.0
        %699 = vmatprep.subr.mxu0 0.0
        %700 = vmatpush1.msra.mxu0 0.0
        %701 = vmatprep.subr.mxu0 0.0
        %702 = vmatpush1.msra.mxu0 0.0
        %703 = vmatprep.subr.mxu0 0.0
        %704 = vmatpush1.msra.mxu0 0.0
        %705 = vmatprep.subr.mxu0 0.0
        %706 = vmatpush1.msra.mxu0 0.0
        %707 = vmatprep.subr.mxu0 0.0
        %708 = vmatpush1.msra.mxu0 0.0
        %709 = vmatprep.subr.mxu0 0.0
        %710 = vmatpush1.msra.mxu0 0.0
        %711 = vmatprep.subr.mxu0 0.0
        %712 = vmatpush1.msra.mxu0 0.0
        %713 = vmatprep.subr.mxu0 0.0
        %714 = vmatpush1.msra.mxu0 0.0
        %715 = vmatprep.subr.mxu0 0.0
        %716 = vmatpush1.msra.mxu0 0.0
        %717 = vmatprep.subr.mxu0 0.0
        %718 = vmatpush1.msra.mxu0 0.0
        %719 = vmatprep.subr.mxu0 0.0
        %720 = vmatpush1.msra.mxu0 0.0
        %721 = vmatprep.subr.mxu0 0.0
        %722 = vmatpush1.msra.mxu0 0.0
        %723 = vmatprep.subr.mxu0 0.0
        %724 = vmatpush1.msra.mxu0 0.0
        %725 = vmatprep.subr.mxu0 0.0
        %726 = vmatpush1.msra.mxu0 0.0
        %727 = vmatprep.subr.mxu0 0.0
        %728 = vmatpush1.msra.mxu0 0.0
        %729 = vmatprep.subr.mxu0 0.0
        %730 = vmatpush1.msra.mxu0 0.0
        %731 = vmatprep.subr.mxu0 0.0
        %732 = vmatpush1.msra.mxu0 0.0
        %733 = vmatprep.subr.mxu0 0.0
        %734 = vmatpush1.msra.mxu0 0.0
        %735 = vmatprep.subr.mxu0 0.0
        %736 = vmatpush1.msra.mxu0 0.0
        %737 = vmatprep.subr.mxu0 0.0
        %738 = vmatpush1.msra.mxu0 0.0
        %739 = vmatprep.mubr.f32.mxu0 0.0
        %740 = vmatmul.mubr.f32.gmra.mrb[0].mxu0 %v664
        %v741 = vpop.f32.mrb[0].mxu0
        %v742 = vadd.f32 0.0, %v741
        %v743 = vpop.f32.mrb[0].mxu0
        %744 = vmatprep.mubr.f32.mxu0 0.0
        %745 = vmatmul.mubr.f32.gmra.mrb[0].mxu0 %v667
        %v746 = vpop.f32.mrb[0].mxu0
        %v747 = vadd.f32 0.0, %v746
        %v748 = vpop.f32.mrb[0].mxu0
        %749 = vmatprep.mubr.f32.mxu0 0.0
        %750 = vmatmul.mubr.f32.gmra.mrb[0].mxu0 %v670
        %v751 = vpop.f32.mrb[0].mxu0
        %v752 = vadd.f32 0.0, %v751
        %v753 = vpop.f32.mrb[0].mxu0
        %754 = vmatprep.mubr.f32.mxu0 0.0
        %755 = vmatmul.mubr.f32.gmra.mrb[0].mxu0 %v673
        %v756 = vpop.f32.mrb[0].mxu0
        %v757 = vadd.f32 0.0, %v756
        %v758 = vpop.f32.mrb[0].mxu0
        %759 = vdwg.mxu0
        %v760 = vadd.f32 %v652, %v742
        %v761 = vadd.f32 %v653, %v747
        %v762 = vadd.f32 %v654, %v752
        %v763 = vadd.f32 %v655, %v757
        %v764 = vld [vmem:[%s3] sm:$0x1]
        %v766 = vlaneseq
        %v767 = vshrl.u32 %v766, 7
        %v768 = vsub.s32 0, %v767
        %v769 = vrot.slane %v764, %v768
        %v771 = vadd.f32 %v760, %v769
        %v772 = vadd.f32 %v761, %v769
        %v773 = vadd.f32 %v762, %v769
        %v774 = vadd.f32 %v763, %v769
        %775 = vst [vmem:[%s277] sm:$0xff] %v771
        %776 = vst [vmem:[%s277 + $0x8] sm:$0xff] %v772
        %777 = vst [vmem:[%s277 + $0x10] sm:$0xff] %v773
        %778 = vst [vmem:[%s277 + $0x18] sm:$0xff] %v774
        %s779 = sand.u32 %s146, 1
        %s780 = scalar_lea.sflag [#allocation4], %s779
        %s781 = sand.u32 %s146, 1
        %s782 = smul.addr %s781, 32
        %s783 = scalar_lea.vmem [#allocation3], %s782
        // Predicated region
        $region37: #{tpu_custom_call.1} parent=35 // pred_check
          %p784 = pneg %p156
        $region38: #{tpu_custom_call.1} parent=35 // pred_check_branch
          %786 = sbr.rel (%p784) target = $region40
        $region39: #{tpu_custom_call.1} parent=35 // pred_region
          %s787 = smul.u32 4, %s23
          %s789 = ssub.s32 512, 512
          %790 = vsyncadd %s780, %s789
          %s791 = smul.addr %s22, 8
          %s792 = sadd.s32 %s787, %s791
          %s793 = smul.addr %s792, 128
          %s794 = scalar_lea.hbm %s4, %s793
          %s795 = sshll.u32 %s783, 4
          %s796 = int_to_ptr.vmem [resolvable:$true] %s795
          %801 = dma.vmem_to_hbm [thread:$0]  %s796, 512, %s794, %s780, 128, 128, 8
        $region40: #{tpu_custom_call.1} parent=35 // pred_fallthru
          _
      $region36: #{tpu_custom_call.1} parent=5 // pred_fallthru
        _
      %p802 = scmp.le.s32.totalorder 2, %s13
      // Predicated region
      $region41: #{tpu_custom_call.1} parent=5 // pred_check
        %p803 = pneg %p802
      $region42: #{tpu_custom_call.1} parent=5 // pred_check_branch
        %805 = sbr.rel (%p803) target = $region44
      $region43: #{tpu_custom_call.1} parent=5 // pred_region
        %s806 = ssub.s32 %s13, 2
        // Predicated region
        $region45: #{tpu_custom_call.1} parent=43 // pred_check
          %p807 = pneg %p162
        $region46: #{tpu_custom_call.1} parent=43 // pred_check_branch
          %809 = sbr.rel (%p807) target = $region48
        $region47: #{tpu_custom_call.1} parent=43 // pred_region
          %s810 = sand.u32 %s147, 1
          %s811 = scalar_lea.sflag [#allocation4], %s810
          %s812 = sand.u32 %s147, 1
          %s813 = smul.addr %s812, 32
          %s814 = scalar_lea.vmem [#allocation3], %s813
          %815 = dma.done %s811, 512
        $region48: #{tpu_custom_call.1} parent=43 // pred_fallthru
          _
      $region44: #{tpu_custom_call.1} parent=5 // pred_fallthru
        _
    $region6: #{tpu_custom_call.1} parent=1 // loop_footer
      %s17 = sadd.s32 1, %s13
    $region7: #{tpu_custom_call.1} parent=1 // loop_footer_branch
      %12 = sbr.rel target = $region3
    $region8: #{tpu_custom_call.1} parent=1 // loop_exit
      _
    %816 = vsyncpa [#allocation4], 1
    %s817 = scalar_lea.sflag [#allocation4], 1
    %818 = vsyncpa %s817, 1

</llo_original>
